<compile_context>
chip_gen: v6e
topology: v6e:2x2x1
jax: 0.10.0
libtpu: 0.0.40
codegen_flags: <defaults>
</compile_context>

<pallas_src>
import functools
import math

import jax
import jax.numpy as jnp
from jax.experimental import pallas as pl
from jax.experimental.pallas import tpu as pltpu

LANES = 128
SUBLANES = 8
MAX_TILE_ROWS = 8192                      # (8192,128) f32 = 4 MiB / stream / buffer
VMEM_INPUT_BUDGET = 32 * 1024 * 1024      # total for double-buffered input streams
VMEM_LIMIT_BYTES = 48 * 1024 * 1024       # fits v7x's 64 MiB physical VMEM w/ headroom

_CLAMP_LO = 1e-4
_CLAMP_HI = 1.0 - 1e-4
_LOG_LO = math.log(_CLAMP_LO)
_LOG_HI = math.log(_CLAMP_HI)


def _cdiv(a, b):
    return -(-a // b)


def _round_up(x, m):
    return (x + m - 1) // m * m


def _num_splits():
    """2 on v7x (two TensorCores/chip), otherwise 1."""
    try:
        kind = jax.devices()[0].device_kind.lower()
    except Exception:
        return 1
    return 2 if ("v7" in kind or "7x" in kind) else 1


def _sublane_multiple(dtype):
    """Minimum legal sublane tile multiple for a dtype (8 f32, 16 bf16, 32 i8)."""
    return SUBLANES * max(1, 4 // jnp.dtype(dtype).itemsize)


def _fold_rows(x):
    """(R,128) -> (8,128) partial sum: adds whole vregs together (VPU only)."""
    r, l = x.shape
    return jnp.sum(x.reshape(r // SUBLANES, SUBLANES, l), axis=0)


# ---------------------------------------------------------------------------
# In-kernel helpers
# ---------------------------------------------------------------------------
def _run_tile(run, *, rows, tile_rows, tiles_per_split, has_partial, has_oob):
    """Dispatch a tile body with the cheapest legal masking strategy.

    run(valid) is called with valid=None on fully-valid tiles (fast path), or
    with a (tile_rows, LANES) bool row mask on the single boundary tile.
    Fully out-of-range replayed tiles are skipped entirely.
    """
    if not (has_partial or has_oob):
        run(None)
        return

    s = pl.program_id(0)
    i = pl.program_id(1)
    base_row = (s * tiles_per_split + i) * tile_rows
    is_full = base_row + tile_rows <= rows

    @pl.when(is_full)
    def _fast():
        run(None)

    in_range = jnp.logical_not(is_full)
    if has_oob:
        in_range = jnp.logical_and(in_range, base_row < rows)

    @pl.when(in_range)
    def _boundary():
        row_ids = base_row + jax.lax.broadcasted_iota(
            jnp.int32, (tile_rows, LANES), 0)
        run(row_ids < rows)


def _focal_tile(x, gt, out_ref):
    """CenterNet focal-loss contribution of one (tile_rows,128) f32 tile."""
    # _sigmoid: hm = clamp(sigmoid(x), 1e-4, 1-1e-4)
    s = jax.nn.sigmoid(x)
    hm = jnp.clip(s, _CLAMP_LO, _CLAMP_HI)
    log_s = jnp.log(s)
    # log(clamp(s)) and log(1-clamp(s)) with a single EUP log:
    #   log(1-sigmoid(x)) == log(sigmoid(x)) - x   (exact identity)
    log_hm = jnp.clip(log_s, _LOG_LO, _LOG_HI)
    log_omh = jnp.clip(log_s - x, _LOG_LO, _LOG_HI)

    pos_inds = (gt == 1.0).astype(jnp.float32)
    neg_inds = (gt < 1.0).astype(jnp.float32)
    omg = 1.0 - gt
    omg2 = omg * omg
    neg_w = omg2 * omg2                    # (1-gt)^4 as two VPU multiplies
    omh = 1.0 - hm

    pos_loss = log_hm * (omh * omh) * pos_inds
    neg_loss = log_omh * (hm * hm) * (neg_w * neg_inds)

    # vreg-resident accumulation in the output block (stays in VMEM across i)
    out_ref[0:SUBLANES, :] = out_ref[0:SUBLANES, :] + _fold_rows(pos_loss + neg_loss)
    out_ref[SUBLANES:2 * SUBLANES, :] = (
        out_ref[SUBLANES:2 * SUBLANES, :] + _fold_rows(pos_inds))


# ---------------------------------------------------------------------------
# Kernels
# ---------------------------------------------------------------------------
def _focal_kernel(hm_ref, gt_ref, out_ref, *, rows, tile_rows, tiles_per_split,
                  has_partial, has_oob):
    """Focal-loss partial sums. Output block (16,128): rows 0..7 accumulate
    (pos_loss + neg_loss), rows 8..15 accumulate num_pos indicators."""
    @pl.when(pl.program_id(1) == 0)
    def _init():
        out_ref[...] = jnp.zeros_like(out_ref)

    def run(valid):
        x = hm_ref[...].astype(jnp.float32)    # upcast per tile
        gt = gt_ref[...].astype(jnp.float32)
        if valid is not None:
            x = jnp.where(valid, x, 0.0)
            gt = jnp.where(valid, gt, 2.0)     # sentinel: neither pos nor neg
        _focal_tile(x, gt, out_ref)

    _run_tile(run, rows=rows, tile_rows=tile_rows, tiles_per_split=tiles_per_split,
              has_partial=has_partial, has_oob=has_oob)


def _l1_kernel(*refs, rows, tile_rows, tiles_per_split, has_partial, has_oob):
    """sum(|pred - gt|) for N (pred, gt) stream pairs in one call.

    refs = (p0, g0, p1, g1, ..., out). Output block rows [8p, 8p+8) accumulate
    the partial sums of pair p."""
    in_refs, out_ref = refs[:-1], refs[-1]
    n_pairs = len(in_refs) // 2

    @pl.when(pl.program_id(1) == 0)
    def _init():
        out_ref[...] = jnp.zeros_like(out_ref)

    def run(valid):
        for p in range(n_pairs):
            d = jnp.abs(in_refs[2 * p][...].astype(jnp.float32)
                        - in_refs[2 * p + 1][...].astype(jnp.float32))
            if valid is not None:
                d = jnp.where(valid, d, 0.0)
            out_ref[p * SUBLANES:(p + 1) * SUBLANES, :] = (
                out_ref[p * SUBLANES:(p + 1) * SUBLANES, :] + _fold_rows(d))

    _run_tile(run, rows=rows, tile_rows=tile_rows, tiles_per_split=tiles_per_split,
              has_partial=has_partial, has_oob=has_oob)


# ---------------------------------------------------------------------------
# Host-side plumbing
# ---------------------------------------------------------------------------
def _to_slab(x, pad_value):
    """Flatten to (rows, 128) in NATIVE dtype. Pads only to a multiple of 128
    elements with a benign sentinel (usually a no-op)."""
    flat = x.reshape(-1)
    total = flat.shape[0]
    padded = _round_up(total, LANES)
    if padded != total:
        # TODO(synk): this copies the whole stream; only triggers when numel % 128 != 0.
        flat = jnp.pad(flat, (0, padded - total),
                       constant_values=jnp.asarray(pad_value, flat.dtype))
    return flat.reshape(-1, LANES)


def _tiled_call(kernel_fn, slabs, *, acc_rows, splits):
    rows = slabs[0].shape[0]
    sub_mult = max(_sublane_multiple(s.dtype) for s in slabs)
    max_itemsize = max(jnp.dtype(s.dtype).itemsize for s in slabs)

    # Per-stream, per-pipeline-buffer VMEM budget -> largest legal tile.
    per_buf = VMEM_INPUT_BUDGET // (2 * len(slabs))
    max_tile_rows = min(MAX_TILE_ROWS, per_buf // (LANES * max_itemsize))
    max_tile_rows = max(sub_mult, max_tile_rows // sub_mult * sub_mult)

    # Don't split tinier than one minimum tile per split.
    splits = max(1, min(splits, _cdiv(rows, sub_mult)))

    # Pick tile_rows so total coverage overshoots rows by as little as possible
    # (avoids replayed full-tile DMAs that would only compute zeros).
    tile0 = min(max_tile_rows, _round_up(_cdiv(rows, splits), sub_mult))
    tiles_per_split = _cdiv(_cdiv(rows, tile0), splits)
    n_total = splits * tiles_per_split
    tile_rows = min(max_tile_rows, _round_up(_cdiv(rows, n_total), sub_mult))

    has_partial = (rows % tile_rows) != 0            # one boundary tile needs a row mask
    has_oob = (n_total - 1) * tile_rows >= rows      # some tiles are fully out of range
    last_in_range = max(0, _cdiv(rows, tile_rows) - 1)

    def in_map(s, i):
        t = s * tiles_per_split + i
        if has_oob:
            # Keep every DMA'd block start in-bounds; kernel skips OOB compute.
            t = jnp.minimum(t, last_in_range)
        return (t, 0)

    kern = functools.partial(kernel_fn, rows=rows, tile_rows=tile_rows,
                             tiles_per_split=tiles_per_split,
                             has_partial=has_partial, has_oob=has_oob)

    out = pl.pallas_call(
        kern,
        out_shape=jax.ShapeDtypeStruct((splits * acc_rows, LANES), jnp.float32),
        grid=(splits, tiles_per_split),
        in_specs=[pl.BlockSpec((tile_rows, LANES), in_map) for _ in slabs],
        out_specs=pl.BlockSpec((acc_rows, LANES), lambda s, i: (s, 0)),
        compiler_params=pltpu.CompilerParams(
            dimension_semantics=("parallel", "arbitrary"),
            vmem_limit_bytes=VMEM_LIMIT_BYTES),
    )(*slabs)
    return out.reshape(splits, acc_rows, LANES)


def ctdet_loss(output, batch, cfg):
    """JAX/Pallas equivalent of CtdetLoss.forward for cfg.PRED.MSE_LOSS == False."""
    assert not cfg["PRED"]["MSE_LOSS"]
    splits = _num_splits()

    hm, wh, reg = output["hm"], output["wh"], output["reg"]
    hm_gt, wh_gt, reg_gt = batch["pred_hm"], batch["pred_wh"], batch["reg"]
    b_wh = wh.shape[0]
    b_reg = reg.shape[0]

    # --- Focal loss over the heatmap stream -------------------------------
    focal_out = _tiled_call(
        _focal_kernel,
        [_to_slab(hm, 0.0), _to_slab(hm_gt, 2.0)],   # gt pad sentinel -> 0 contribution
        acc_rows=2 * SUBLANES, splits=splits)
    loss_sum = jnp.sum(focal_out[:, :SUBLANES, :])
    num_pos = jnp.sum(focal_out[:, SUBLANES:, :])
    # FocalLoss finalization: pos_loss == 0 when num_pos == 0, so -loss_sum == -neg_sum.
    hm_loss = jnp.where(num_pos == 0.0, -loss_sum,
                        -loss_sum / jnp.maximum(num_pos, 1.0))

    # --- L1 losses: wh and reg fused into a single pallas_call -------------
    wh_s, whg_s = _to_slab(wh, 0.0), _to_slab(wh_gt, 0.0)
    reg_s, regg_s = _to_slab(reg, 0.0), _to_slab(reg_gt, 0.0)
    if wh_s.shape[0] == reg_s.shape[0]:
        l1_out = _tiled_call(_l1_kernel, [wh_s, whg_s, reg_s, regg_s],
                             acc_rows=2 * SUBLANES, splits=splits)
        wh_sum = jnp.sum(l1_out[:, :SUBLANES, :])
        reg_sum = jnp.sum(l1_out[:, SUBLANES:, :])
    else:
        # Fallback (different-sized heads): two calls, same kernel.
        wh_out = _tiled_call(_l1_kernel, [wh_s, whg_s],
                             acc_rows=SUBLANES, splits=splits)
        reg_out = _tiled_call(_l1_kernel, [reg_s, regg_s],
                              acc_rows=SUBLANES, splits=splits)
        wh_sum = jnp.sum(wh_out)
        reg_sum = jnp.sum(reg_out)

    wh_loss = wh_sum / b_wh
    off_loss = reg_sum / b_reg

    loss = (cfg["PRED"]["HM_W"] * hm_loss
            + cfg["PRED"]["WH_W"] * wh_loss
            + cfg["PRED"]["REG_W"] * off_loss)

    loss_stats = {"pred_loss": loss, "hm_loss": hm_loss,
                  "wh_loss": wh_loss, "off_loss": off_loss}
    return loss, loss_stats


def _reference_loss(output, batch, cfg):
    """Pure-JAX reference (mirrors the PyTorch math) for validation."""
    hm = jnp.clip(jax.nn.sigmoid(output["hm"].astype(jnp.float32)), 0.0001, 1.0 - 0.0001)
    gt = batch["pred_hm"].astype(jnp.float32)
    pos = (gt == 1.0).astype(jnp.float32)
    neg = (gt < 1.0).astype(jnp.float32)
    nw = (1.0 - gt) ** 4
    pos_loss = jnp.sum(jnp.log(hm) * (1.0 - hm) ** 2 * pos)
    neg_loss = jnp.sum(jnp.log(1.0 - hm) * hm ** 2 * nw * neg)
    num_pos = jnp.sum(pos)
    hm_loss = jnp.where(num_pos == 0.0, -neg_loss,
                        -(pos_loss + neg_loss) / jnp.maximum(num_pos, 1.0))
    wh_loss = jnp.sum(jnp.abs(output["wh"] - batch["pred_wh"])) / output["wh"].shape[0]
    off_loss = jnp.sum(jnp.abs(output["reg"] - batch["reg"])) / output["reg"].shape[0]
    return (cfg["PRED"]["HM_W"] * hm_loss
            + cfg["PRED"]["WH_W"] * wh_loss
            + cfg["PRED"]["REG_W"] * off_loss)


if __name__ == "__main__":
    # Deterministic cfg (CenterNet-style weights); MSE_LOSS=False -> focal path.
    cfg = {"PRED": {"MSE_LOSS": False, "HM_W": 1.0, "WH_W": 0.1, "REG_W": 1.0}}

    B, C, H, W = 2, 4, 16, 16   # heatmap classes C=4; wh/reg have 2 channels
    key = jax.random.PRNGKey(0)
    k = jax.random.split(key, 6)

    hm_logits = jax.random.normal(k[0], (B, C, H, W), jnp.float32)
    wh_pred = jax.random.normal(k[1], (B, 2, H, W), jnp.float32)
    reg_pred = jax.random.normal(k[2], (B, 2, H, W), jnp.float32)

    # Ground-truth heatmap in [0, 1) with a few exact 1.0 peaks (positives).
    hm_gt = jax.random.uniform(k[3], (B, C, H, W), jnp.float32, 0.0, 0.999)
    peak_mask = jax.random.uniform(k[4], (B, C, H, W)) > 0.98
    hm_gt = jnp.where(peak_mask, 1.0, hm_gt)

    wh_gt = jax.random.normal(k[5], (B, 2, H, W), jnp.float32)
    reg_gt = jax.random.normal(jax.random.PRNGKey(1), (B, 2, H, W), jnp.float32)

    output = {"hm": hm_logits, "wh": wh_pred, "reg": reg_pred}
    batch = {"pred_hm": hm_gt, "pred_wh": wh_gt, "reg": reg_gt}

    loss, stats = ctdet_loss(output, batch, cfg)
    loss = jax.block_until_ready(loss)

    ref = jax.block_until_ready(_reference_loss(output, batch, cfg))
    assert jnp.allclose(loss, ref, rtol=5e-3, atol=5e-3), (loss, ref)

    print("KERNEL_OK")
</pallas_src>

<mosaic_0001>
module attributes {stable_mosaic.version = 11 : i64} {
  func.func @_focal_kernel(%arg0: i32, %arg1: i32, %arg2: memref<16x128xf32, #tpu.memory_space<vmem>>, %arg3: memref<16x128xf32, #tpu.memory_space<vmem>>, %arg4: memref<16x128xf32, #tpu.memory_space<vmem>>) attributes {dimension_semantics = [#tpu.dimension_semantics<parallel>, #tpu.dimension_semantics<arbitrary>], iteration_bounds = array<i64: 1, 1>, scalar_prefetch = 0 : i64, scratch_operands = 0 : i64, tpu.core_type = #tpu.core_type<tc>, window_params = [{transform_indices = @transform_0, window_bounds = array<i64: 16, 128>}, {transform_indices = @transform_1, window_bounds = array<i64: 16, 128>}, {transform_indices = @transform_2, window_bounds = array<i64: 16, 128>}]} {
    %c0_i32 = arith.constant 0 : i32
    %0 = arith.cmpi eq, %arg1, %c0_i32 : i32
    %1 = arith.extui %0 : i1 to i32
    %c0_i32_0 = arith.constant 0 : i32
    %2 = arith.cmpi ne, %1, %c0_i32_0 : i32
    scf.if %2 {
      %cst_23 = arith.constant 0.000000e+00 : f32
      %56 = vector.broadcast %cst_23 : f32 to vector<16x128xf32>
      %c0_24 = arith.constant 0 : index
      %c0_25 = arith.constant 0 : index
      %57 = vector.load %arg4[%c0_24, %c0_25] : memref<16x128xf32, #tpu.memory_space<vmem>>, vector<16x128xf32>
      tpu.vector_store %arg4[%c0_24, %c0_25], %56 {strides = array<i32>} : memref<16x128xf32, #tpu.memory_space<vmem>>, vector<16x128xf32>,
    } else {
    }
    %c0 = arith.constant 0 : index
    %c0_1 = arith.constant 0 : index
    %3 = vector.load %arg2[%c0, %c0_1] : memref<16x128xf32, #tpu.memory_space<vmem>>, vector<16x128xf32>
    %c0_2 = arith.constant 0 : index
    %c0_3 = arith.constant 0 : index
    %4 = vector.load %arg3[%c0_2, %c0_3] : memref<16x128xf32, #tpu.memory_space<vmem>>, vector<16x128xf32>
    %5 = arith.negf %3 : vector<16x128xf32>
    %6 = math.exp %5 : vector<16x128xf32>
    %cst = arith.constant 1.000000e+00 : f32
    %7 = vector.broadcast %cst : f32 to vector<16x128xf32>
    %8 = arith.addf %7, %6 : vector<16x128xf32>
    %9 = arith.divf %7, %8 : vector<16x128xf32>
    %cst_4 = arith.constant 9.99999974E-5 : f32
    %cst_5 = arith.constant 0.999899983 : f32
    %10 = vector.broadcast %cst_4 : f32 to vector<16x128xf32>
    %11 = arith.maximumf %10, %9 : vector<16x128xf32>
    %12 = vector.broadcast %cst_5 : f32 to vector<16x128xf32>
    %13 = arith.minimumf %12, %11 : vector<16x128xf32>
    %14 = math.log %9 : vector<16x128xf32>
    %cst_6 = arith.constant -9.21034049 : f32
    %cst_7 = arith.constant -1.000050e-04 : f32
    %15 = vector.broadcast %cst_6 : f32 to vector<16x128xf32>
    %16 = arith.maximumf %15, %14 : vector<16x128xf32>
    %17 = vector.broadcast %cst_7 : f32 to vector<16x128xf32>
    %18 = arith.minimumf %17, %16 : vector<16x128xf32>
    %19 = arith.subf %14, %3 : vector<16x128xf32>
    %cst_8 = arith.constant -9.21034049 : f32
    %cst_9 = arith.constant -1.000050e-04 : f32
    %20 = vector.broadcast %cst_8 : f32 to vector<16x128xf32>
    %21 = arith.maximumf %20, %19 : vector<16x128xf32>
    %22 = vector.broadcast %cst_9 : f32 to vector<16x128xf32>
    %23 = arith.minimumf %22, %21 : vector<16x128xf32>
    %cst_10 = arith.constant 1.000000e+00 : f32
    %24 = vector.broadcast %cst_10 : f32 to vector<16x128xf32>
    %25 = arith.cmpf oeq, %4, %24 : vector<16x128xf32>
    %26 = arith.extui %25 : vector<16x128xi1> to vector<16x128xi32>
    %27 = arith.sitofp %26 : vector<16x128xi32> to vector<16x128xf32>
    %cst_11 = arith.constant 1.000000e+00 : f32
    %28 = vector.broadcast %cst_11 : f32 to vector<16x128xf32>
    %29 = arith.cmpf olt, %4, %28 : vector<16x128xf32>
    %30 = arith.extui %29 : vector<16x128xi1> to vector<16x128xi32>
    %31 = arith.sitofp %30 : vector<16x128xi32> to vector<16x128xf32>
    %cst_12 = arith.constant 1.000000e+00 : f32
    %32 = vector.broadcast %cst_12 : f32 to vector<16x128xf32>
    %33 = arith.subf %32, %4 : vector<16x128xf32>
    %34 = arith.mulf %33, %33 : vector<16x128xf32>
    %35 = arith.mulf %34, %34 : vector<16x128xf32>
    %cst_13 = arith.constant 1.000000e+00 : f32
    %36 = vector.broadcast %cst_13 : f32 to vector<16x128xf32>
    %37 = arith.subf %36, %13 : vector<16x128xf32>
    %38 = arith.mulf %37, %37 : vector<16x128xf32>
    %39 = arith.mulf %18, %38 : vector<16x128xf32>
    %40 = arith.mulf %39, %27 : vector<16x128xf32>
    %41 = arith.mulf %13, %13 : vector<16x128xf32>
    %42 = arith.mulf %23, %41 : vector<16x128xf32>
    %43 = arith.mulf %35, %31 : vector<16x128xf32>
    %44 = arith.mulf %42, %43 : vector<16x128xf32>
    %c0_14 = arith.constant 0 : index
    %c0_15 = arith.constant 0 : index
    %45 = vector.load %arg4[%c0_14, %c0_15] : memref<16x128xf32, #tpu.memory_space<vmem>>, vector<8x128xf32>
    %46 = arith.addf %40, %44 : vector<16x128xf32>
    %47 = vector.shape_cast %46 : vector<16x128xf32> to vector<2x8x128xf32>
    %cst_16 = arith.constant dense<0.000000e+00> : vector<8x128xf32>
    %48 = vector.multi_reduction <add>, %47, %cst_16 [0] : vector<2x8x128xf32> to vector<8x128xf32>
    %49 = arith.addf %45, %48 : vector<8x128xf32>
    %c0_17 = arith.constant 0 : index
    %c0_18 = arith.constant 0 : index
    %50 = vector.load %arg4[%c0_17, %c0_18] : memref<16x128xf32, #tpu.memory_space<vmem>>, vector<8x128xf32>
    tpu.vector_store %arg4[%c0_17, %c0_18], %49 {strides = array<i32>} : memref<16x128xf32, #tpu.memory_space<vmem>>, vector<8x128xf32>,
    %c8 = arith.constant 8 : index
    %c0_19 = arith.constant 0 : index
    %51 = vector.load %arg4[%c8, %c0_19] : memref<16x128xf32, #tpu.memory_space<vmem>>, vector<8x128xf32>
    %52 = vector.shape_cast %27 : vector<16x128xf32> to vector<2x8x128xf32>
    %cst_20 = arith.constant dense<0.000000e+00> : vector<8x128xf32>
    %53 = vector.multi_reduction <add>, %52, %cst_20 [0] : vector<2x8x128xf32> to vector<8x128xf32>
    %54 = arith.addf %51, %53 : vector<8x128xf32>
    %c8_21 = arith.constant 8 : index
    %c0_22 = arith.constant 0 : index
    %55 = vector.load %arg4[%c8_21, %c0_22] : memref<16x128xf32, #tpu.memory_space<vmem>>, vector<8x128xf32>
    tpu.vector_store %arg4[%c8_21, %c0_22], %54 {strides = array<i32>} : memref<16x128xf32, #tpu.memory_space<vmem>>, vector<8x128xf32>,
    return
  }
  func.func @transform_0(%arg0: i32, %arg1: i32) -> (i32, i32) {
    %c1_i32 = arith.constant 1 : i32
    %0 = arith.muli %arg0, %c1_i32 : i32
    %1 = arith.addi %0, %arg1 : i32
    %c0_i32 = arith.constant 0 : i32
    %c0_i32_0 = arith.constant 0 : i32
    return %1, %c0_i32 : i32, i32
  }
  func.func @transform_1(%arg0: i32, %arg1: i32) -> (i32, i32) {
    %c1_i32 = arith.constant 1 : i32
    %0 = arith.muli %arg0, %c1_i32 : i32
    %1 = arith.addi %0, %arg1 : i32
    %c0_i32 = arith.constant 0 : i32
    %c0_i32_0 = arith.constant 0 : i32
    return %1, %c0_i32 : i32, i32
  }
  func.func @transform_2(%arg0: i32, %arg1: i32) -> (i32, i32) {
    %c0_i32 = arith.constant 0 : i32
    %c0_i32_0 = arith.constant 0 : i32
    return %arg0, %c0_i32 : i32, i32
  }
}

</mosaic_0001>

<llo_original>
// kernel: tpu_custom_call.1
$region0: #{tpu_custom_call.1}
  #allocation0 [shape = 'u32[]', space=smem, size = 0x4, offset = 0x4, fixed_abs, tag = 'smem constant byte address 0x4 - core index']
  #allocation1 [shape = 'u32[144,128]{1,0:T(1,128)}', space=vmem, size = 0x12000, scoped, tag = 'internal scratch']
  %s0 = inlined_call_operand.hbm [shape: f32[16,128], index: 0, kind: input, shape index: {}]
  %s1 = inlined_call_operand.hbm [shape: f32[16,128], index: 1, kind: input, shape index: {}]
  %s2 = inlined_call_operand.hbm [shape: f32[16,128], index: 2, kind: output, shape index: {}]
  %s3 = sld [smem:[#allocation0]]
  $region30: #{tpu_custom_call.1} parent=0
    _
  %s5 = ssub.s32 1, %s3
  %s6 = scalar_select 0, %s5, %s3
  $region1: #{tpu_custom_call.1} parent=0
    #allocation2 [shape = 'u8[8192]{0}', space=vmem, size = 0x2000, scoped, tag = 'input window, operand 0, single buffered']
    #allocation3 [shape = 's32[1]{0}', space=sflag, size = 0x4, scoped, tag = 'scoped memory for tpu_custom_call.1']
    #allocation4 [shape = 's32[1]{0}', space=sflag, size = 0x4, scoped, tag = 'scoped memory for tpu_custom_call.1']
    #allocation5 [shape = 'u8[8192]{0}', space=vmem, size = 0x2000, scoped, tag = 'input window, operand 1, single buffered']
    #allocation6 [shape = 's32[1]{0}', space=sflag, size = 0x4, scoped, tag = 'scoped memory for tpu_custom_call.1']
    #allocation7 [shape = 'u8[8192]{0}', space=vmem, size = 0x2000, scoped, tag = 'output window, operand 0, single buffered']
    %7 = vsyncpa [#allocation3], 0
    %8 = vsyncpa [#allocation6], 0
    %9 = vsyncpa [#allocation4], 0
    // Predicated region
    $region2: #{tpu_custom_call.1} parent=1 // pred_check
      _
    $region3: #{tpu_custom_call.1} parent=1 // pred_check_branch
      %11 = sbr.rel (0) target = $region5
    $region4: #{tpu_custom_call.1} parent=1 // pred_region
      %s12 = sadd.s32 0, 0
      %s13 = smul.u32 2, %s12
      %s15 = ssub.s32 256, 256
      %16 = vsyncadd [#allocation3], %s15
      %s17 = smul.addr %s13, 128
      %s18 = scalar_lea.hbm %s0, %s17
      %s19 = sshll.u32 [#allocation2], 4
      %s20 = int_to_ptr.vmem [resolvable:$true] %s19
      %25 = dma.hbm_to_vmem [thread:$0]  %s18, 256, %s20, [#allocation3], 128, 128, 8
    $region5: #{tpu_custom_call.1} parent=1 // pred_fallthru
      _
    // Predicated region
    $region6: #{tpu_custom_call.1} parent=1 // pred_check
      _
    $region7: #{tpu_custom_call.1} parent=1 // pred_check_branch
      %27 = sbr.rel (0) target = $region9
    $region8: #{tpu_custom_call.1} parent=1 // pred_region
      %s28 = sadd.s32 0, 0
      %s29 = smul.u32 2, %s28
      %s31 = ssub.s32 256, 256
      %32 = vsyncadd [#allocation6], %s31
      %s33 = smul.addr %s29, 128
      %s34 = scalar_lea.hbm %s1, %s33
      %s35 = sshll.u32 [#allocation5], 4
      %s36 = int_to_ptr.vmem [resolvable:$true] %s35
      %41 = dma.hbm_to_vmem [thread:$0]  %s34, 256, %s36, [#allocation6], 128, 128, 8
    $region9: #{tpu_custom_call.1} parent=1 // pred_fallthru
      _
    // Predicated region
    $region10: #{tpu_custom_call.1} parent=1 // pred_check
      _
    $region11: #{tpu_custom_call.1} parent=1 // pred_check_branch
      %43 = sbr.rel (0) target = $region13
    $region12: #{tpu_custom_call.1} parent=1 // pred_region
      %44 = dma.done [#allocation3], 256
    $region13: #{tpu_custom_call.1} parent=1 // pred_fallthru
      _
    // Predicated region
    $region14: #{tpu_custom_call.1} parent=1 // pred_check
      _
    $region15: #{tpu_custom_call.1} parent=1 // pred_check_branch
      %46 = sbr.rel (0) target = $region17
    $region16: #{tpu_custom_call.1} parent=1 // pred_region
      %47 = dma.done [#allocation6], 256
    $region17: #{tpu_custom_call.1} parent=1 // pred_fallthru
      _
    %s48 = sadd.s32 0, 0
    %s49 = smul.u32 2, %s48
    %s50 = sadd.s32 0, 0
    %s51 = smul.u32 2, %s50
    %p52 = scmp.eq.s32.totalorder 0, 0
    // Predicated region
    $region18: #{tpu_custom_call.1} parent=1 // pred_check
      %p53 = pneg %p52
    $region19: #{tpu_custom_call.1} parent=1 // pred_check_branch
      %55 = sbr.rel (%p53) target = $region21
    $region20: #{tpu_custom_call.1} parent=1 // pred_region
      %56 = vst [vmem:[#allocation7] sm:$0xff] 0.0
      %57 = vst [vmem:[#allocation7 + $0x8] sm:$0xff] 0.0
    $region21: #{tpu_custom_call.1} parent=1 // pred_fallthru
      _
    %v58 = vld [vmem:[#allocation2] sm:$0xff]
    %v59 = vld [vmem:[#allocation2 + $0x8] sm:$0xff]
    %v60 = vld [vmem:[#allocation5] sm:$0xff]
    %v61 = vld [vmem:[#allocation5 + $0x8] sm:$0xff]
    %v62 = vxor.u32 %v58, 2147483648
    %v63 = vxor.u32 %v59, 2147483648
    %v64 = vmul.f32 %v62, 1.442695
    %v65 = vpow.pop %v64
    %v66 = vmul.f32 %v63, 1.442695
    %v67 = vpow.pop %v66
    %v68 = vadd.f32 %v65, 1.0
    %v69 = vadd.f32 %v67, 1.0
    %v70 = vrcp.pop %v68
    %v71 = vmul.f32 1.0, %v70
    %v72 = vrcp.pop %v69
    %v73 = vmul.f32 1.0, %v72
    %v74 = vmax.f32 %v71, 0.0001
    %v75 = vmax.f32 %v73, 0.0001
    %v76 = vmin.f32 %v74, 0.9999
    %v77 = vmin.f32 %v75, 0.9999
    %v78 = vlog2.pop %v71
    %v79 = vmul.f32 %v78, 0.6931472
    %v80 = vlog2.pop %v73
    %v81 = vmul.f32 %v80, 0.6931472
    %v82 = vmax.f32 %v79, -9.2103405
    %v83 = vmax.f32 %v81, -9.2103405
    %v84 = vmin.f32 %v82, -0.000100005
    %v85 = vmin.f32 %v83, -0.000100005
    %v86 = vsub.f32 %v79, %v58
    %v87 = vsub.f32 %v81, %v59
    %v88 = vmax.f32 %v86, -9.2103405
    %v89 = vmax.f32 %v87, -9.2103405
    %v90 = vmin.f32 %v88, -0.000100005
    %v91 = vmin.f32 %v89, -0.000100005
    %vm92 = vcmp.eq.f32.partialorder %v60, 1.0
    %vm93 = vcmp.eq.f32.partialorder %v61, 1.0
    %v94 = vsel %vm92, 1, 0
    %v95 = vsel %vm93, 1, 0
    %v96 = vcvt.s32.f32 %v94
    %v97 = vcvt.s32.f32 %v95
    %vm98 = vcmp.lt.f32.partialorder %v60, 1.0
    %vm99 = vcmp.lt.f32.partialorder %v61, 1.0
    %v100 = vsel %vm98, 1, 0
    %v101 = vsel %vm99, 1, 0
    %v102 = vcvt.s32.f32 %v100
    %v103 = vcvt.s32.f32 %v101
    %v104 = vsub.f32 1.0, %v60
    %v105 = vsub.f32 1.0, %v61
    %v106 = vmul.f32 %v104, %v104
    %v107 = vmul.f32 %v105, %v105
    %v108 = vmul.f32 %v106, %v106
    %v109 = vmul.f32 %v107, %v107
    %v110 = vsub.f32 1.0, %v76
    %v111 = vsub.f32 1.0, %v77
    %v112 = vmul.f32 %v110, %v110
    %v113 = vmul.f32 %v111, %v111
    %v114 = vmul.f32 %v84, %v112
    %v115 = vmul.f32 %v85, %v113
    %v116 = vmul.f32 %v114, %v96
    %v117 = vmul.f32 %v115, %v97
    %v118 = vmul.f32 %v76, %v76
    %v119 = vmul.f32 %v77, %v77
    %v120 = vmul.f32 %v90, %v118
    %v121 = vmul.f32 %v91, %v119
    %v122 = vmul.f32 %v108, %v102
    %v123 = vmul.f32 %v109, %v103
    %v124 = vmul.f32 %v120, %v122
    %v125 = vmul.f32 %v121, %v123
    %v126 = vld [vmem:[#allocation7] sm:$0xff]
    %v127 = vadd.f32 %v116, %v124
    %v128 = vadd.f32 %v117, %v125
    %v129 = vadd.f32 %v127, %v128
    %v130 = vadd.f32 %v126, %v129
    %131 = vst [vmem:[#allocation7] sm:$0xff] %v130
    %v132 = vld [vmem:[#allocation7 + $0x8] sm:$0xff]
    %v133 = vadd.f32 %v96, %v97
    %v134 = vadd.f32 %v132, %v133
    %135 = vst [vmem:[#allocation7 + $0x8] sm:$0xff] %v134
    // Predicated region
    $region22: #{tpu_custom_call.1} parent=1 // pred_check
      _
    $region23: #{tpu_custom_call.1} parent=1 // pred_check_branch
      %137 = sbr.rel (0) target = $region25
    $region24: #{tpu_custom_call.1} parent=1 // pred_region
      %s139 = ssub.s32 256, 256
      %140 = vsyncadd [#allocation4], %s139
      %s141 = sshll.u32 [#allocation7], 4
      %s142 = int_to_ptr.vmem [resolvable:$true] %s141
      %147 = dma.vmem_to_hbm [thread:$0]  %s142, 256, %s2, [#allocation4], 128, 128, 8
    $region25: #{tpu_custom_call.1} parent=1 // pred_fallthru
      _
    // Predicated region
    $region26: #{tpu_custom_call.1} parent=1 // pred_check
      _
    $region27: #{tpu_custom_call.1} parent=1 // pred_check_branch
      %149 = sbr.rel (0) target = $region29
    $region28: #{tpu_custom_call.1} parent=1 // pred_region
      %150 = dma.done [#allocation4], 256
    $region29: #{tpu_custom_call.1} parent=1 // pred_fallthru
      _
    %151 = vsyncpa [#allocation3], 1
    %152 = vsyncpa [#allocation6], 1
    %153 = vsyncpa [#allocation4], 1

</llo_original>
